<compile_context>
chip_gen: v5e
topology: v5e:2x2
jax: 0.10.0
libtpu: 0.0.40
codegen_flags: <defaults>
</compile_context>

<pallas_src>
import jax
import jax.numpy as jnp
from jax.experimental import pallas as pl
from jax.experimental.pallas import tpu as pltpu


def _round_up(x, m):
    return (x + m - 1) // m * m


def _make_uc_kernel(TB, TN, B, N, binary_targets):
    need_row_mask = (B % TB) != 0
    need_col_mask = (N % TN) != 0
    n_lane_groups = TN // 128

    def lane_fold(x):
        # (TB, TN) -> (TB, 128) using only lane-aligned vreg adds (pure VPU);
        # keeps the cross-lane XLU reduction out of the hot loop.
        acc = x[:, 0:128]
        for k in range(1, n_lane_groups):
            acc = acc + x[:, k * 128:(k + 1) * 128]
        return acc

    def kernel(pred_ref, true_ref, loss_ref, acc0_ref, acc1_ref):
        bi = pl.program_id(0)
        nj = pl.program_id(1)

        @pl.when(nj == 0)
        def _():
            acc0_ref[...] = jnp.zeros_like(acc0_ref)
            acc1_ref[...] = jnp.zeros_like(acc1_ref)

        # In-kernel upcast: HBM traffic stays at native dtype width.
        p = pred_ref[...].astype(jnp.float32)
        t_raw = true_ref[...]

        # Ragged-tail mask (only emitted when actually needed).
        valid = None
        if need_col_mask:
            col = jax.lax.broadcasted_iota(jnp.int32, (TB, TN), 1) + nj * TN
            valid = col < N
        if need_row_mask:
            row = jax.lax.broadcasted_iota(jnp.int32, (TB, TN), 0) + bi * TB
            rmask = row < B
            valid = rmask if valid is None else jnp.logical_and(valid, rmask)

        if binary_targets:
            # Single EUP exp per element; exact for targets in {0, 1}.
            t_on = t_raw != 0
            e = jnp.exp(jnp.where(t_on, -p, p))
            if valid is not None:
                e = jnp.where(valid, e, 0.0)      # garbage in OOB tail -> 0
            te = jnp.where(t_on, e, 0.0)
            acc0_ref[...] += lane_fold(e)         # = sum_neg + sum_pos (partial, per lane)
            acc1_ref[...] += lane_fold(te)        # = sum_pos            (partial, per lane)
        else:
            # Faithful general path (soft labels allowed): two exps per element.
            t = t_raw.astype(jnp.float32)
            neg_c = (1.0 - t) * jnp.exp(p)
            pos_c = t * jnp.exp(-p)
            if valid is not None:
                neg_c = jnp.where(valid, neg_c, 0.0)
                pos_c = jnp.where(valid, pos_c, 0.0)
            acc0_ref[...] += lane_fold(neg_c)     # sum_neg (partial, per lane)
            acc1_ref[...] += lane_fold(pos_c)     # sum_pos (partial, per lane)

        @pl.when(nj == pl.num_programs(1) - 1)
        def _():
            # Single cross-lane (XLU) reduce per batch tile, then the log.
            s0 = jnp.sum(acc0_ref[...], axis=1, keepdims=True)   # (TB, 1)
            s1 = jnp.sum(acc1_ref[...], axis=1, keepdims=True)   # (TB, 1)
            if binary_targets:
                sum_pos = s1
                sum_neg = s0 - s1
            else:
                sum_neg = s0
                sum_pos = s1
            # Rows past B (ragged batch tail) accumulated zeros -> loss 0; the
            # output DMA for the tail block is clipped to the array extent anyway.
            loss_ref[...] = jnp.log(1.0 + sum_neg * sum_pos)

    return kernel


def unified_contrastive(y_pred, y_true, reduction="mean", *,
                        binary_targets=True, tb=256, tn=2048):
    """UnifiedContrastive loss.

    y_pred: [B, N] float (f32 / bf16 / f16) logits.
    y_true: [B, N] targets; any int/bool/float dtype. With binary_targets=True
            (default) targets must be in {0, 1} (single-exp fast path); pass
            binary_targets=False for soft labels.
    Returns the scalar mean loss, or per-row losses [B] if reduction != 'mean'.
    """
    assert y_pred.shape == y_true.shape and y_pred.ndim == 2
    B, N = y_pred.shape

    # Batch tile: multiple of 8. If the whole batch would fit in one tile,
    # split it into two so v7x's two TensorCores both get work.
    B8 = _round_up(B, 8)
    if B8 <= tb:
        TB = max(8, _round_up((B8 + 1) // 2, 8))
    else:
        TB = tb
    # Class tile: multiple of 128, never rounded past the (8,128)-granule need.
    TN = min(tn, _round_up(N, 128))

    grid = (pl.cdiv(B, TB), pl.cdiv(N, TN))

    bytes_accessed = B * N * (y_pred.dtype.itemsize + y_true.dtype.itemsize) + B * 4
    cost = pl.CostEstimate(
        flops=6 * B * N,
        transcendentals=(1 if binary_targets else 2) * B * N + B,
        bytes_accessed=bytes_accessed,
    )

    kernel = _make_uc_kernel(TB, TN, B, N, binary_targets)

    loss_rows = pl.pallas_call(
        kernel,
        out_shape=jax.ShapeDtypeStruct((B, 1), jnp.float32),
        grid_spec=pltpu.PrefetchScalarGridSpec(
            num_scalar_prefetch=0,
            grid=grid,
            in_specs=[
                pl.BlockSpec((TB, TN), lambda i, j: (i, j)),
                pl.BlockSpec((TB, TN), lambda i, j: (i, j)),
            ],
            out_specs=pl.BlockSpec((TB, 1), lambda i, j: (i, 0)),
            scratch_shapes=[
                pltpu.VMEM((TB, 128), jnp.float32),   # lane-dense accumulator 0
                pltpu.VMEM((TB, 128), jnp.float32),   # lane-dense accumulator 1
            ],
        ),
        compiler_params=pltpu.CompilerParams(
            dimension_semantics=("parallel", "arbitrary"),
            vmem_limit_bytes=40 * 1024 * 1024,
        ),
        cost_estimate=cost,
    )(y_pred, y_true)

    if reduction == "mean":
        return jnp.mean(loss_rows)
    return loss_rows[:, 0]


def unified_contrastive_ref(y_pred, y_true, reduction="mean"):
    y_pred = y_pred.astype(jnp.float32)
    y_true = y_true.astype(jnp.float32)
    sum_neg = jnp.sum((1.0 - y_true) * jnp.exp(y_pred), axis=1)
    sum_pos = jnp.sum(y_true * jnp.exp(-y_pred), axis=1)
    loss = jnp.log(1.0 + sum_neg * sum_pos)
    return jnp.mean(loss) if reduction == "mean" else loss


if __name__ == "__main__":
    key = jax.random.PRNGKey(0)
    k1, k2, k3, k4, k5, k6 = jax.random.split(key, 6)

    # Case 1: f32 logits + int8 binary targets (narrow target dtype, 2 batch tiles).
    B, N = 16, 256
    y_pred = jax.random.normal(k1, (B, N), dtype=jnp.float32)
    y_true = (jax.random.uniform(k2, (B, N)) > 0.8).astype(jnp.int8)
    out = jax.block_until_ready(unified_contrastive(y_pred, y_true))
    ref = unified_contrastive_ref(y_pred, y_true)
    assert jnp.allclose(out, ref, rtol=1e-5, atol=1e-5), (out, ref)

    # Case 2: ragged shapes (no host-side pad; in-kernel tail masking),
    #         bf16 logits + int8 targets.
    B2, N2 = 20, 200
    y_pred2 = jax.random.normal(k3, (B2, N2), dtype=jnp.float32).astype(jnp.bfloat16)
    y_true2 = (jax.random.uniform(k4, (B2, N2)) > 0.8).astype(jnp.int8)
    out2 = jax.block_until_ready(unified_contrastive(y_pred2, y_true2))
    ref2 = unified_contrastive_ref(y_pred2, y_true2)
    assert jnp.allclose(out2, ref2, rtol=1e-4, atol=1e-4), (out2, ref2)

    # Case 3: per-row losses (reduction != 'mean') with soft labels (general path).
    B3, N3 = 8, 128
    y_pred3 = jax.random.normal(k5, (B3, N3), dtype=jnp.float32)
    y_true3 = jax.random.uniform(k6, (B3, N3))
    out3 = jax.block_until_ready(
        unified_contrastive(y_pred3, y_true3, reduction="none", binary_targets=False))
    ref3 = unified_contrastive_ref(y_pred3, y_true3, reduction="none")
    assert jnp.allclose(out3, ref3, rtol=1e-5, atol=1e-5), (out3, ref3)

    print("KERNEL_OK")
</pallas_src>

<mosaic_0001>
module attributes {stable_mosaic.version = 11 : i64} {
  func.func @kernel(%arg0: i32, %arg1: i32, %arg2: memref<8x256xf32, #tpu.memory_space<vmem>>, %arg3: memref<8x256xi8, #tpu.memory_space<vmem>>, %arg4: memref<8x1xf32, #tpu.memory_space<vmem>>, %arg5: memref<8x128xf32, #tpu.memory_space<vmem>>, %arg6: memref<8x128xf32, #tpu.memory_space<vmem>>) attributes {dimension_semantics = [#tpu.dimension_semantics<parallel>, #tpu.dimension_semantics<arbitrary>], iteration_bounds = array<i64: 2, 1>, scalar_prefetch = 0 : i64, scratch_operands = 2 : i64, tpu.core_type = #tpu.core_type<tc>, window_params = [{transform_indices = @transform_0, window_bounds = array<i64: 8, 256>}, {transform_indices = @transform_1, window_bounds = array<i64: 8, 256>}, {transform_indices = @transform_2, window_bounds = array<i64: 8, 1>}]} {
    %c0_i32 = arith.constant 0 : i32
    %0 = arith.cmpi eq, %arg1, %c0_i32 : i32
    %1 = arith.extui %0 : i1 to i32
    %c0_i32_0 = arith.constant 0 : i32
    %2 = arith.cmpi ne, %1, %c0_i32_0 : i32
    scf.if %2 {
      %cst_15 = arith.constant 0.000000e+00 : f32
      %28 = vector.broadcast %cst_15 : f32 to vector<8x128xf32>
      %c0_16 = arith.constant 0 : index
      %c0_17 = arith.constant 0 : index
      %29 = vector.load %arg5[%c0_16, %c0_17] : memref<8x128xf32, #tpu.memory_space<vmem>>, vector<8x128xf32>
      tpu.vector_store %arg5[%c0_16, %c0_17], %28 {strides = array<i32>} : memref<8x128xf32, #tpu.memory_space<vmem>>, vector<8x128xf32>,
      %cst_18 = arith.constant 0.000000e+00 : f32
      %30 = vector.broadcast %cst_18 : f32 to vector<8x128xf32>
      %c0_19 = arith.constant 0 : index
      %c0_20 = arith.constant 0 : index
      %31 = vector.load %arg6[%c0_19, %c0_20] : memref<8x128xf32, #tpu.memory_space<vmem>>, vector<8x128xf32>
      tpu.vector_store %arg6[%c0_19, %c0_20], %30 {strides = array<i32>} : memref<8x128xf32, #tpu.memory_space<vmem>>, vector<8x128xf32>,
    } else {
    }
    %c0 = arith.constant 0 : index
    %c0_1 = arith.constant 0 : index
    %3 = vector.load %arg2[%c0, %c0_1] : memref<8x256xf32, #tpu.memory_space<vmem>>, vector<8x256xf32>
    %c0_2 = arith.constant 0 : index
    %c0_3 = arith.constant 0 : index
    %4 = vector.load %arg3[%c0_2, %c0_3] : memref<8x256xi8, #tpu.memory_space<vmem>>, vector<8x256xi8>
    %c0_i8 = arith.constant 0 : i8
    %5 = vector.broadcast %c0_i8 : i8 to vector<8x256xi8>
    %6 = arith.cmpi ne, %4, %5 : vector<8x256xi8>
    %cst = arith.constant 0.000000e+00 : f32
    %7 = vector.broadcast %cst : f32 to vector<8x256xf32>
    %8 = arith.subf %7, %3 : vector<8x256xf32>
    %9 = arith.select %6, %8, %3 : vector<8x256xi1>, vector<8x256xf32>
    %10 = math.exp %9 : vector<8x256xf32>
    %cst_4 = arith.constant 0.000000e+00 : f32
    %11 = vector.broadcast %cst_4 : f32 to vector<8x256xf32>
    %12 = arith.select %6, %10, %11 : vector<8x256xi1>, vector<8x256xf32>
    %c0_5 = arith.constant 0 : index
    %c0_6 = arith.constant 0 : index
    %13 = vector.load %arg5[%c0_5, %c0_6] : memref<8x128xf32, #tpu.memory_space<vmem>>, vector<8x128xf32>
    %14 = vector.extract_strided_slice %10 {offsets = [0, 0], sizes = [8, 128], strides = [1, 1]} : vector<8x256xf32> to vector<8x128xf32>
    %15 = vector.extract_strided_slice %10 {offsets = [0, 128], sizes = [8, 128], strides = [1, 1]} : vector<8x256xf32> to vector<8x128xf32>
    %16 = arith.addf %14, %15 : vector<8x128xf32>
    %17 = arith.addf %13, %16 : vector<8x128xf32>
    %c0_7 = arith.constant 0 : index
    %c0_8 = arith.constant 0 : index
    %18 = vector.load %arg5[%c0_7, %c0_8] : memref<8x128xf32, #tpu.memory_space<vmem>>, vector<8x128xf32>
    tpu.vector_store %arg5[%c0_7, %c0_8], %17 {strides = array<i32>} : memref<8x128xf32, #tpu.memory_space<vmem>>, vector<8x128xf32>,
    %c0_9 = arith.constant 0 : index
    %c0_10 = arith.constant 0 : index
    %19 = vector.load %arg6[%c0_9, %c0_10] : memref<8x128xf32, #tpu.memory_space<vmem>>, vector<8x128xf32>
    %20 = vector.extract_strided_slice %12 {offsets = [0, 0], sizes = [8, 128], strides = [1, 1]} : vector<8x256xf32> to vector<8x128xf32>
    %21 = vector.extract_strided_slice %12 {offsets = [0, 128], sizes = [8, 128], strides = [1, 1]} : vector<8x256xf32> to vector<8x128xf32>
    %22 = arith.addf %20, %21 : vector<8x128xf32>
    %23 = arith.addf %19, %22 : vector<8x128xf32>
    %c0_11 = arith.constant 0 : index
    %c0_12 = arith.constant 0 : index
    %24 = vector.load %arg6[%c0_11, %c0_12] : memref<8x128xf32, #tpu.memory_space<vmem>>, vector<8x128xf32>
    tpu.vector_store %arg6[%c0_11, %c0_12], %23 {strides = array<i32>} : memref<8x128xf32, #tpu.memory_space<vmem>>, vector<8x128xf32>,
    %c0_i32_13 = arith.constant 0 : i32
    %25 = arith.cmpi eq, %arg1, %c0_i32_13 : i32
    %26 = arith.extui %25 : i1 to i32
    %c0_i32_14 = arith.constant 0 : i32
    %27 = arith.cmpi ne, %26, %c0_i32_14 : i32
    scf.if %27 {
      %c0_15 = arith.constant 0 : index
      %c0_16 = arith.constant 0 : index
      %28 = vector.load %arg5[%c0_15, %c0_16] : memref<8x128xf32, #tpu.memory_space<vmem>>, vector<8x128xf32>
      %cst_17 = arith.constant dense<0.000000e+00> : vector<8xf32>
      %29 = vector.multi_reduction <add>, %28, %cst_17 [1] : vector<8x128xf32> to vector<8xf32>
      %30 = vector.shape_cast %29 : vector<8xf32> to vector<8x1xf32>
      %c0_18 = arith.constant 0 : index
      %c0_19 = arith.constant 0 : index
      %31 = vector.load %arg6[%c0_18, %c0_19] : memref<8x128xf32, #tpu.memory_space<vmem>>, vector<8x128xf32>
      %cst_20 = arith.constant dense<0.000000e+00> : vector<8xf32>
      %32 = vector.multi_reduction <add>, %31, %cst_20 [1] : vector<8x128xf32> to vector<8xf32>
      %33 = vector.shape_cast %32 : vector<8xf32> to vector<8x1xf32>
      %34 = arith.subf %30, %33 : vector<8x1xf32>
      %35 = arith.mulf %34, %33 : vector<8x1xf32>
      %cst_21 = arith.constant 1.000000e+00 : f32
      %36 = vector.broadcast %cst_21 : f32 to vector<8x1xf32>
      %37 = arith.addf %36, %35 : vector<8x1xf32>
      %38 = math.log %37 : vector<8x1xf32>
      %c0_22 = arith.constant 0 : index
      %c0_23 = arith.constant 0 : index
      %39 = vector.load %arg4[%c0_22, %c0_23] : memref<8x1xf32, #tpu.memory_space<vmem>>, vector<8x1xf32>
      tpu.vector_store %arg4[%c0_22, %c0_23], %38 {strides = array<i32>} : memref<8x1xf32, #tpu.memory_space<vmem>>, vector<8x1xf32>,
    } else {
    }
    return
  }
  func.func @transform_0(%arg0: i32, %arg1: i32) -> (i32, i32) {
    %c0_i32 = arith.constant 0 : i32
    return %arg0, %arg1 : i32, i32
  }
  func.func @transform_1(%arg0: i32, %arg1: i32) -> (i32, i32) {
    %c0_i32 = arith.constant 0 : i32
    return %arg0, %arg1 : i32, i32
  }
  func.func @transform_2(%arg0: i32, %arg1: i32) -> (i32, i32) {
    %c0_i32 = arith.constant 0 : i32
    %c0_i32_0 = arith.constant 0 : i32
    return %arg0, %c0_i32 : i32, i32
  }
}

</mosaic_0001>

<llo_original>
// kernel: tpu_custom_call.1
$region0: #{tpu_custom_call.1}
  #allocation0 [shape = 'u32[]', space=smem, size = 0x4, offset = 0x4, fixed_abs, tag = 'smem constant byte address 0x4 - core index']
  #allocation1 [shape = 'u32[72,128]{1,0:T(1,128)}', space=vmem, size = 0x9000, scoped, tag = 'internal scratch']
  #allocation2 [shape = 'f32[8,128]{1,0:T(8,128)}', space=vmem, size = 0x1000, scoped, tag = 'scratch operand']
  #allocation3 [shape = 'f32[8,128]{1,0:T(8,128)}', space=vmem, size = 0x1000, scoped, tag = 'scratch operand']
  %s0 = inlined_call_operand.hbm [shape: f32[16,256], index: 0, kind: input, shape index: {}]
  %s1 = inlined_call_operand.hbm [shape: s8[16,256], index: 1, kind: input, shape index: {}]
  %s2 = inlined_call_operand.vmem [shape: f32[16,1], index: 2, kind: output, shape index: {}]
  %s3 = sld [smem:[#allocation0]]
  $region57: #{tpu_custom_call.1} parent=0
    _
  %s5 = ssub.s32 1, %s3
  %s6 = scalar_select 0, %s5, %s3
  $region1: #{tpu_custom_call.1} parent=0
    #allocation4 [shape = 'u8[16384]{0}', space=vmem, size = 0x4000, scoped, tag = 'input window, operand 0']
    #allocation5 [shape = 's32[2]{0}', space=sflag, size = 0x8, scoped, tag = 'scoped memory for tpu_custom_call.1']
    #allocation6 [shape = 'u8[4096]{0}', space=vmem, size = 0x1000, scoped, tag = 'input window, operand 1']
    #allocation7 [shape = 's32[2]{0}', space=sflag, size = 0x8, scoped, tag = 'scoped memory for tpu_custom_call.1']
    %7 = vsyncpa [#allocation5], 0
    %s8 = scalar_lea.sflag [#allocation5], 1
    %9 = vsyncpa %s8, 0
    %10 = vsyncpa [#allocation7], 0
    %s11 = scalar_lea.sflag [#allocation7], 1
    %12 = vsyncpa %s11, 0
    loop: start=0, step=1, limit=4
    $region2: #{tpu_custom_call.1} parent=1 // loop_pre_header
      _
    $region3: #{tpu_custom_call.1} parent=1 // loop_header
      %s14 = sphi 0, %s18
      %p15 = scmp.ge.s32.totalorder %s14, 4
      %s21 = sphi 0, %s33
      %s22 = sphi 0, %s29
      %s23 = sphi 0, %s21
      %s24 = sphi 0, %s22
      %s25 = sphi 0, %s23
      %s26 = sphi 0, %s24
      %s38 = sphi 0, %s40
      %s41 = sphi 0, %s38
      %s42 = sphi 0, %s41
      %s58 = sphi 0, %s42
      %s66 = sphi 0, %s68
      %s69 = sphi 0, %s66
      %s70 = sphi 0, %s69
      %s86 = sphi 0, %s70
      %s92 = sphi 0, %s94
      %s95 = sphi 0, %s92
      %s96 = sphi 0, %s95
      %s112 = sphi 0, %s96
    $region4: #{tpu_custom_call.1} parent=1 // loop_header_branch
      %17 = sbr.rel (%p15) target = $region8
    $region5: #{tpu_custom_call.1} parent=1 // loop_body
      %s19 = ssub.s32 %s14, 1
      %s20 = ssub.s32 %s14, 2
      %s27 = sadd.s32 1, %s22
      %p28 = scmp.ge.s32.totalorder %s27, 1
      %s29 = scalar_select %p28, 0, %s27
      %s30 = sadd.s32 1, %s21
      %s31 = scalar_select %p28, %s30, %s21
      %p32 = scmp.ge.s32.totalorder %s31, 2
      %s33 = scalar_select %p32, 0, %s31
      %s34 = ssub.s32 %s21, %s33
      %s35 = ssub.s32 %s22, %s29
      %s36 = sor.u32 %s34, %s35
      %p37 = scmp.eq.s32.totalorder %s36, 0
      %s39 = sadd.s32 %s38, 1
      %s40 = scalar_select %p37, %s38, %s39
      %p43 = pneg %p37
      %p44 = scmp.eq.s32.totalorder %s14, 1
      %p45 = por %p43, %p44
      %p46 = scmp.ne.s32.totalorder %s38, %s41
      %p47 = scmp.eq.s32.totalorder %s14, 0
      %p48 = por %p46, %p47
      %p49 = scmp.ne.s32.totalorder %s38, %s41
      %p50 = scmp.eq.s32.totalorder %s19, 1
      %p51 = por %p49, %p50
      %p52 = scmp.ne.s32.totalorder %s41, %s42
      %p53 = scmp.eq.s32.totalorder %s19, 0
      %p54 = por %p52, %p53
      %p55 = scmp.ne.s32.totalorder %s41, %s42
      %p56 = scmp.eq.s32.totalorder %s20, 1
      %p57 = por %p55, %p56
      %p59 = scmp.ne.s32.totalorder %s42, %s58
      %p60 = scmp.eq.s32.totalorder %s20, 0
      %p61 = por %p59, %p60
      %s62 = ssub.s32 %s21, %s33
      %s63 = ssub.s32 %s22, %s29
      %s64 = sor.u32 %s62, %s63
      %p65 = scmp.eq.s32.totalorder %s64, 0
      %s67 = sadd.s32 %s66, 1
      %s68 = scalar_select %p65, %s66, %s67
      %p71 = pneg %p65
      %p72 = scmp.eq.s32.totalorder %s14, 1
      %p73 = por %p71, %p72
      %p74 = scmp.ne.s32.totalorder %s66, %s69
      %p75 = scmp.eq.s32.totalorder %s14, 0
      %p76 = por %p74, %p75
      %p77 = scmp.ne.s32.totalorder %s66, %s69
      %p78 = scmp.eq.s32.totalorder %s19, 1
      %p79 = por %p77, %p78
      %p80 = scmp.ne.s32.totalorder %s69, %s70
      %p81 = scmp.eq.s32.totalorder %s19, 0
      %p82 = por %p80, %p81
      %p83 = scmp.ne.s32.totalorder %s69, %s70
      %p84 = scmp.eq.s32.totalorder %s20, 1
      %p85 = por %p83, %p84
      %p87 = scmp.ne.s32.totalorder %s70, %s86
      %p88 = scmp.eq.s32.totalorder %s20, 0
      %p89 = por %p87, %p88
      %s90 = ssub.s32 %s21, %s33
      %p91 = scmp.eq.s32.totalorder %s90, 0
      %s93 = sadd.s32 %s92, 1
      %s94 = scalar_select %p91, %s92, %s93
      %p97 = pneg %p91
      %p98 = scmp.eq.s32.totalorder %s14, 1
      %p99 = por %p97, %p98
      %p100 = scmp.ne.s32.totalorder %s92, %s95
      %p101 = scmp.eq.s32.totalorder %s14, 0
      %p102 = por %p100, %p101
      %p103 = scmp.ne.s32.totalorder %s92, %s95
      %p104 = scmp.eq.s32.totalorder %s19, 1
      %p105 = por %p103, %p104
      %p106 = scmp.ne.s32.totalorder %s95, %s96
      %p107 = scmp.eq.s32.totalorder %s19, 0
      %p108 = por %p106, %p107
      %p109 = scmp.ne.s32.totalorder %s95, %s96
      %p110 = scmp.eq.s32.totalorder %s20, 1
      %p111 = por %p109, %p110
      %p113 = scmp.ne.s32.totalorder %s96, %s112
      %p114 = scmp.eq.s32.totalorder %s20, 0
      %p115 = por %p113, %p114
      %p116 = scmp.le.s32.totalorder 1, %s14
      %p117 = scmp.lt.s32.totalorder %s14, 3
      %p118 = pnand %p116, %p117
      %p119 = pneg %p118
      // Predicated region
      $region9: #{tpu_custom_call.1} parent=5 // pred_check
        _
      $region10: #{tpu_custom_call.1} parent=5 // pred_check_branch
        %121 = sbr.rel (%p118) target = $region12
      $region11: #{tpu_custom_call.1} parent=5 // pred_region
        %s122 = ssub.s32 %s14, 1
      $region12: #{tpu_custom_call.1} parent=5 // pred_fallthru
        _
      %p123 = scmp.lt.s32.totalorder %s14, 2
      // Predicated region
      $region13: #{tpu_custom_call.1} parent=5 // pred_check
        %p124 = pneg %p123
      $region14: #{tpu_custom_call.1} parent=5 // pred_check_branch
        %126 = sbr.rel (%p124) target = $region16
      $region15: #{tpu_custom_call.1} parent=5 // pred_region
        // Predicated region
        $region17: #{tpu_custom_call.1} parent=15 // pred_check
          %p127 = pneg %p48
        $region18: #{tpu_custom_call.1} parent=15 // pred_check_branch
          %129 = sbr.rel (%p127) target = $region20
        $region19: #{tpu_custom_call.1} parent=15 // pred_region
          %s130 = sand.u32 %s38, 1
          %s131 = scalar_lea.sflag [#allocation5], %s130
          %s132 = sand.u32 %s38, 1
          %s133 = smul.addr %s132, 16
          %s134 = scalar_lea.vmem [#allocation4], %s133
          %s135 = smul.u32 2, %s22
          %137 = vsyncadd %s131, 0
          %s138 = smul.addr %s21, 2
          %s139 = sadd.s32 %s135, %s138
          %s140 = smul.addr %s139, 8
          %s141 = scalar_lea.hbm %s0, %s140
          %s143 = sshll.u32 %s141, 4
          %s144 = int_to_ptr.hbm [resolvable:$true] %s143
          %s145 = sshll.u32 %s134, 4
          %s146 = int_to_ptr.vmem [resolvable:$true] %s145
          %148 = dma.hbm_to_vmem [thread:$0]  %s144, 256, %s146, %s131
        $region20: #{tpu_custom_call.1} parent=15 // pred_fallthru
          _
        // Predicated region
        $region21: #{tpu_custom_call.1} parent=15 // pred_check
          %p149 = pneg %p76
        $region22: #{tpu_custom_call.1} parent=15 // pred_check_branch
          %151 = sbr.rel (%p149) target = $region24
        $region23: #{tpu_custom_call.1} parent=15 // pred_region
          %s152 = sand.u32 %s66, 1
          %s153 = scalar_lea.sflag [#allocation7], %s152
          %s154 = sand.u32 %s66, 1
          %s155 = smul.addr %s154, 4
          %s156 = scalar_lea.vmem [#allocation6], %s155
          %s157 = smul.u32 2, %s22
          %159 = vsyncadd %s153, 0
          %s160 = smul.addr %s21, 2
          %s161 = sadd.s32 %s157, %s160
          %s162 = smul.addr %s161, 2
          %s163 = scalar_lea.hbm %s1, %s162
          %s165 = sshll.u32 %s163, 4
          %s166 = int_to_ptr.hbm [resolvable:$true] %s165
          %s167 = sshll.u32 %s156, 4
          %s168 = int_to_ptr.vmem [resolvable:$true] %s167
          %170 = dma.hbm_to_vmem [thread:$0]  %s166, 64, %s168, %s153
        $region24: #{tpu_custom_call.1} parent=15 // pred_fallthru
          _
      $region16: #{tpu_custom_call.1} parent=5 // pred_fallthru
        _
      %p171 = scmp.le.s32.totalorder 1, %s14
      %p172 = scmp.lt.s32.totalorder %s14, 3
      %p173 = pnand %p171, %p172
      %p174 = pneg %p173
      // Predicated region
      $region25: #{tpu_custom_call.1} parent=5 // pred_check
        _
      $region26: #{tpu_custom_call.1} parent=5 // pred_check_branch
        %176 = sbr.rel (%p173) target = $region28
      $region27: #{tpu_custom_call.1} parent=5 // pred_region
        %s177 = ssub.s32 %s14, 1
        %s178 = sand.u32 %s41, 1
        %s179 = scalar_lea.sflag [#allocation5], %s178
        %s180 = sand.u32 %s41, 1
        %s181 = smul.addr %s180, 16
        %s182 = scalar_lea.vmem [#allocation4], %s181
        // Predicated region
        $region29: #{tpu_custom_call.1} parent=27 // pred_check
          %p183 = pneg %p54
        $region30: #{tpu_custom_call.1} parent=27 // pred_check_branch
          %185 = sbr.rel (%p183) target = $region32
        $region31: #{tpu_custom_call.1} parent=27 // pred_region
          %187 = dma.done %s179, 256
        $region32: #{tpu_custom_call.1} parent=27 // pred_fallthru
          _
        %s188 = sand.u32 %s69, 1
        %s189 = scalar_lea.sflag [#allocation7], %s188
        %s190 = sand.u32 %s69, 1
        %s191 = smul.addr %s190, 4
        %s192 = scalar_lea.vmem [#allocation6], %s191
        // Predicated region
        $region33: #{tpu_custom_call.1} parent=27 // pred_check
          %p193 = pneg %p82
        $region34: #{tpu_custom_call.1} parent=27 // pred_check_branch
          %195 = sbr.rel (%p193) target = $region36
        $region35: #{tpu_custom_call.1} parent=27 // pred_region
          %197 = dma.done %s189, 64
        $region36: #{tpu_custom_call.1} parent=27 // pred_fallthru
          _
        %s198 = sand.u32 %s41, 1
        %s199 = scalar_lea.sflag [#allocation5], %s198
        %s200 = sand.u32 %s41, 1
        %s201 = smul.addr %s200, 16
        %s202 = scalar_lea.vmem [#allocation4], %s201
        %p203 = pneg %p54
        %p204 = pneg %p51
        %s205 = sand.u32 %s69, 1
        %s206 = scalar_lea.sflag [#allocation7], %s205
        %s207 = sand.u32 %s69, 1
        %s208 = smul.addr %s207, 4
        %s209 = scalar_lea.vmem [#allocation6], %s208
        %p210 = pneg %p82
        %p211 = pneg %p79
        %p212 = pneg %p108
        %p213 = pneg %p105
        %p214 = scmp.lt.s32.totalorder %s23, 1
        %s215 = scalar_select %p214, %s23, 1
        %s216 = smul.addr %s215, 8
        %s217 = scalar_lea.vmem %s2, %s216
        %s218 = smul.u32 2, %s24
        %s219 = smul.u32 2, %s24
        %p220 = scmp.lt.s32.totalorder %s23, 1
        %s221 = scalar_select %p220, %s23, 1
        %s222 = smul.addr %s221, 8
        %s223 = scalar_lea.vmem %s2, %s222
        %p226 = scmp.eq.s32.totalorder %s24, 0
        // Predicated region
        $region37: #{tpu_custom_call.1} parent=27 // pred_check
          %p227 = pneg %p226
        $region38: #{tpu_custom_call.1} parent=27 // pred_check_branch
          %229 = sbr.rel (%p227) target = $region40
        $region39: #{tpu_custom_call.1} parent=27 // pred_region
          %230 = vst [vmem:[#allocation2] sm:$0xff] 0.0
          %231 = vst [vmem:[#allocation3] sm:$0xff] 0.0
        $region40: #{tpu_custom_call.1} parent=27 // pred_fallthru
          _
        %v232 = vld [vmem:[%s182] sm:$0xff]
        %v233 = vld [vmem:[%s182 + $0x8] sm:$0xff]
        %v234 = vld [vmem:[%s192] sm:$0xf]
        %vm235 = vnez %v234
        %v236 = vsub.f32 0.0, %v232
        %v237 = vsub.f32 0.0, %v233
        %v238 = vsel %vm235, 16843009, 0
        %v239 = vunpack.c.0.s8 %v238
        %v240 = vunpack.c.1.s8 %v238
        %vm241 = vcmp.ne.s32.totalorder %v239, 0
        %vm242 = vcmp.ne.s32.totalorder %v240, 0
        %v243 = vsel %vm241, %v236, %v232
        %v244 = vsel %vm242, %v237, %v233
        %v245 = vmul.f32 %v243, 1.442695
        %v246 = vpow.pop %v245
        %v247 = vmul.f32 %v244, 1.442695
        %v248 = vpow.pop %v247
        %v249 = vsel %vm241, %v246, 0.0
        %v250 = vsel %vm242, %v248, 0.0
        %v251 = vld [vmem:[#allocation2] sm:$0xff]
        %v252 = vadd.f32 %v246, %v248
        %v253 = vadd.f32 %v251, %v252
        %254 = vst [vmem:[#allocation2] sm:$0xff] %v253
        %v255 = vld [vmem:[#allocation3] sm:$0xff]
        %v256 = vadd.f32 %v249, %v250
        %v257 = vadd.f32 %v255, %v256
        %258 = vst [vmem:[#allocation3] sm:$0xff] %v257
        // Predicated region
        $region41: #{tpu_custom_call.1} parent=27 // pred_check
          %p259 = pneg %p226
        $region42: #{tpu_custom_call.1} parent=27 // pred_check_branch
          %261 = sbr.rel (%p259) target = $region44
        $region43: #{tpu_custom_call.1} parent=27 // pred_region
          %v262 = vld [vmem:[#allocation2] sm:$0xff]
          %263 = vadd.xlane.f32.xlu0 %v262
          %v264 = vpop.xlane.xlu0 %263
          %v265 = vld [vmem:[#allocation3] sm:$0xff]
          %266 = vadd.xlane.f32.xlu0 %v265
          %v267 = vpop.xlane.xlu0 %266
          %v268 = vsub.f32 %v264, %v267
          %v269 = vmul.f32 %v268, %v267
          %v270 = vadd.f32 %v269, 1.0
          %v271 = vlog2.pop %v270
          %v272 = vmul.f32 %v271, 0.6931472
          %vm273 = vcmask 7168
          %274 = vst.msk [vmem:[%s223] sm:$0xff] %vm273, %v272
        $region44: #{tpu_custom_call.1} parent=27 // pred_fallthru
          _
        %p275 = scmp.lt.s32.totalorder %s23, 1
        %s276 = scalar_select %p275, %s23, 1
        %s277 = smul.addr %s276, 8
        %s278 = scalar_lea.vmem %s2, %s277
        // Predicated region
        $region45: #{tpu_custom_call.1} parent=27 // pred_check
          %p279 = pneg %p105
        $region46: #{tpu_custom_call.1} parent=27 // pred_check_branch
          %281 = sbr.rel (%p279) target = $region48
        $region47: #{tpu_custom_call.1} parent=27 // pred_region
          _
        $region48: #{tpu_custom_call.1} parent=27 // pred_fallthru
          _
      $region28: #{tpu_custom_call.1} parent=5 // pred_fallthru
        _
      %p282 = scmp.le.s32.totalorder 2, %s14
      // Predicated region
      $region49: #{tpu_custom_call.1} parent=5 // pred_check
        %p283 = pneg %p282
      $region50: #{tpu_custom_call.1} parent=5 // pred_check_branch
        %285 = sbr.rel (%p283) target = $region52
      $region51: #{tpu_custom_call.1} parent=5 // pred_region
        %s286 = ssub.s32 %s14, 2
        // Predicated region
        $region53: #{tpu_custom_call.1} parent=51 // pred_check
          %p287 = pneg %p111
        $region54: #{tpu_custom_call.1} parent=51 // pred_check_branch
          %289 = sbr.rel (%p287) target = $region56
        $region55: #{tpu_custom_call.1} parent=51 // pred_region
          %p290 = scmp.lt.s32.totalorder %s25, 1
          %s291 = scalar_select %p290, %s25, 1
          %s292 = smul.addr %s291, 8
          %s293 = scalar_lea.vmem %s2, %s292
        $region56: #{tpu_custom_call.1} parent=51 // pred_fallthru
          _
      $region52: #{tpu_custom_call.1} parent=5 // pred_fallthru
        _
    $region6: #{tpu_custom_call.1} parent=1 // loop_footer
      %s18 = sadd.s32 1, %s14
    $region7: #{tpu_custom_call.1} parent=1 // loop_footer_branch
      %13 = sbr.rel target = $region3
    $region8: #{tpu_custom_call.1} parent=1 // loop_exit
      _
    %294 = vsyncpa [#allocation5], 1
    %s295 = scalar_lea.sflag [#allocation5], 1
    %296 = vsyncpa %s295, 1
    %297 = vsyncpa [#allocation7], 1
    %s298 = scalar_lea.sflag [#allocation7], 1
    %299 = vsyncpa %s298, 1

</llo_original>
